<compile_context>
chip_gen: v6e
topology: v6e:2x2x1
jax: 0.10.0
libtpu: 0.0.40
codegen_flags: <defaults>
</compile_context>

<pallas_src>
import functools

import jax
import jax.numpy as jnp
import numpy as np
from jax.experimental import pallas as pl
from jax.experimental.pallas import tpu as pltpu

LEAKY_SLOPE = 0.2   # nn.LeakyReLU(0.2)
BN_EPS = 1e-5       # nn.BatchNorm2d default eps


# ---------------------------------------------------------------------------
# Fused kernel: conv (one MXU GEMM) + bias + training-mode BatchNorm2d +
# LeakyReLU(0.2). Everything operates on a (Cout, N*Ho*Wo) lane-dense tile
# that stays in VMEM/vregs; the output is written once, already in NCHW order.
# ---------------------------------------------------------------------------
def _deconv_fused_kernel(w_ref, patch_ref, b_ref, gamma_ref, beta_ref, out_ref,
                         *, n_batch, m_per_batch, inv_count):
    # Conv as a single lane-dense GEMM: (Cout, K) @ (K, N*Ho*Wo).
    y = jnp.dot(w_ref[...], patch_ref[...], preferred_element_type=jnp.float32)
    y = y + b_ref[...]                                   # (Cout, 1) broadcast over lanes

    # Training-mode BatchNorm2d: per-channel stats over all N*Ho*Wo positions
    # (== the lane axis). Two-pass (centered) variance, biased normalization.
    mean = jnp.sum(y, axis=1, keepdims=True) * inv_count
    centered = y - mean
    var = jnp.sum(centered * centered, axis=1, keepdims=True) * inv_count
    scale = gamma_ref[...] * jax.lax.rsqrt(var + BN_EPS)  # fold gamma into the scale
    z = centered * scale + beta_ref[...]

    # LeakyReLU(0.2)
    act = jnp.where(z >= 0, z, LEAKY_SLOPE * z)

    # Columns are ordered (n, oh, ow), so batch n is the lane-aligned slice
    # [:, n*Ho*Wo : (n+1)*Ho*Wo] -> store directly as (N, Cout, Ho*Wo) (NCHW-ready).
    for n in range(n_batch):
        out_ref[n] = act[:, n * m_per_batch:(n + 1) * m_per_batch].astype(out_ref.dtype)


def deconv_forward(x_nchw, weight_oihw, bias, gamma, beta, *,
                   scale_factor=2, padding=1):
    N, Cin, H, W = x_nchw.shape
    Cout, _, KH, KW = weight_oihw.shape

    # ---- wrapper-side layout plumbing (no FLOPs) ----------------------------
    # 1) F.interpolate(scale_factor, mode='nearest') == integer repeat.
    x_up = jnp.repeat(jnp.repeat(x_nchw, scale_factor, axis=2), scale_factor, axis=3)
    Hu, Wu = H * scale_factor, W * scale_factor
    Ho = Hu + 2 * padding - KH + 1                       # stride=1, dilation=1
    Wo = Wu + 2 * padding - KW + 1
    # 2) zero-pad for the conv.
    x_p = jnp.pad(x_up, ((0, 0), (0, 0), (padding, padding), (padding, padding)))
    # 3) im2col: rows ordered (kh, kw, cin), columns ordered (n, oh, ow) so the
    #    kernel's single GEMM output is (Cout, N*Ho*Wo) already in NCHW order.
    taps = [x_p[:, :, kh:kh + Ho, kw:kw + Wo]            # each (N, Cin, Ho, Wo)
            for kh in range(KH) for kw in range(KW)]
    patch = jnp.stack(taps, axis=0)                      # (KH*KW, N, Cin, Ho, Wo)
    patch = patch.transpose(0, 2, 1, 3, 4).reshape(KH * KW * Cin, N * Ho * Wo)
    # 4) weights OIHW -> (Cout, KH*KW*Cin) with matching (kh, kw, cin) row order.
    w2 = jnp.transpose(weight_oihw, (0, 2, 3, 1)).reshape(Cout, KH * KW * Cin)
    b2 = bias.reshape(Cout, 1)
    gamma2 = gamma.reshape(Cout, 1)
    beta2 = beta.reshape(Cout, 1)

    m = Ho * Wo
    out = pl.pallas_call(
        functools.partial(_deconv_fused_kernel, n_batch=N, m_per_batch=m,
                          inv_count=1.0 / float(N * m)),
        out_shape=jax.ShapeDtypeStruct((N, Cout, m), jnp.float32),
        in_specs=[pl.BlockSpec(memory_space=pltpu.MemorySpace.VMEM)] * 5,
        out_specs=pl.BlockSpec(memory_space=pltpu.MemorySpace.VMEM),
    )(w2, patch, b2, gamma2, beta2)

    return out.reshape(N, Cout, Ho, Wo)                  # contiguous, zero-cost


# ---------------------------------------------------------------------------
# Pure-JAX reference (matches PyTorch DeConv.forward in training mode).
# ---------------------------------------------------------------------------
def deconv_reference(x, w, b, gamma, beta, *, scale_factor=2, padding=1):
    x_up = jnp.repeat(jnp.repeat(x, scale_factor, axis=2), scale_factor, axis=3)
    y = jax.lax.conv_general_dilated(
        x_up, w, window_strides=(1, 1),
        padding=((padding, padding), (padding, padding)),
        dimension_numbers=('NCHW', 'OIHW', 'NCHW'))
    y = y + b[None, :, None, None]
    mean = jnp.mean(y, axis=(0, 2, 3), keepdims=True)
    var = jnp.mean((y - mean) ** 2, axis=(0, 2, 3), keepdims=True)
    z = ((y - mean) / jnp.sqrt(var + BN_EPS)
         * gamma[None, :, None, None] + beta[None, :, None, None])
    return jnp.where(z >= 0, z, LEAKY_SLOPE * z)


if __name__ == "__main__":
    key = jax.random.PRNGKey(0)
    k1, k2, k3, k4, k5 = jax.random.split(key, 5)

    # DeConv(scale_factor=2, input_channels=4, output_channels=8,
    #        kernel_size=3, stride=1, padding=1, batch_norm=True,
    #        activation=LeakyReLU(0.2))
    N, Cin, H, W = 2, 4, 16, 16
    Cout, K = 8, 3
    scale_factor, padding = 2, 1

    x = jax.random.normal(k1, (N, Cin, H, W), jnp.float32)
    weight = 0.1 * jax.random.normal(k2, (Cout, Cin, K, K), jnp.float32)   # OIHW
    bias = 0.1 * jax.random.normal(k3, (Cout,), jnp.float32)
    gamma = 1.0 + 0.1 * jax.random.normal(k4, (Cout,), jnp.float32)        # BN weight
    beta = 0.1 * jax.random.normal(k5, (Cout,), jnp.float32)               # BN bias
    # TODO(synk): BatchNorm running-mean/var updates are training-side state and
    # do not affect the returned forward value; they are not modeled here.

    out = deconv_forward(x, weight, bias, gamma, beta,
                         scale_factor=scale_factor, padding=padding)
    out = jax.block_until_ready(out)

    ref = deconv_reference(x, weight, bias, gamma, beta,
                           scale_factor=scale_factor, padding=padding)
    assert out.shape == (N, Cout, H * scale_factor, W * scale_factor)
    np.testing.assert_allclose(np.asarray(out), np.asarray(ref), atol=2e-3, rtol=2e-3)

    print("KERNEL_OK")
</pallas_src>

<mosaic_0001>
module attributes {stable_mosaic.version = 11 : i64} {
  func.func @_deconv_fused_kernel(%arg0: memref<8x36xf32, #tpu.memory_space<vmem>>, %arg1: memref<36x2048xf32, #tpu.memory_space<vmem>>, %arg2: memref<8x1xf32, #tpu.memory_space<vmem>>, %arg3: memref<8x1xf32, #tpu.memory_space<vmem>>, %arg4: memref<8x1xf32, #tpu.memory_space<vmem>>, %arg5: memref<2x8x1024xf32, #tpu.memory_space<vmem>>) attributes {dimension_semantics = [], scalar_prefetch = 0 : i64, scratch_operands = 0 : i64, tpu.core_type = #tpu.core_type<tc>} {
    %c0 = arith.constant 0 : index
    %c0_0 = arith.constant 0 : index
    %0 = vector.load %arg0[%c0, %c0_0] : memref<8x36xf32, #tpu.memory_space<vmem>>, vector<8x36xf32>
    %c0_1 = arith.constant 0 : index
    %c0_2 = arith.constant 0 : index
    %1 = vector.load %arg1[%c0_1, %c0_2] : memref<36x2048xf32, #tpu.memory_space<vmem>>, vector<36x2048xf32>
    %cst = arith.constant dense<0.000000e+00> : vector<8x2048xf32>
    %2 = tpu.matmul %0, %1, %cst {dimension_numbers = #tpu.dot_dimension_numbers<[1], [0], [0], [1], [0, 0, 1, 1], [], []>} : vector<8x36xf32>, vector<36x2048xf32>, vector<8x2048xf32> -> vector<8x2048xf32>
    %c0_3 = arith.constant 0 : index
    %c0_4 = arith.constant 0 : index
    %3 = vector.load %arg2[%c0_3, %c0_4] : memref<8x1xf32, #tpu.memory_space<vmem>>, vector<8x1xf32>
    %4 = vector.broadcast %3 : vector<8x1xf32> to vector<8x2048xf32>
    %5 = arith.addf %2, %4 : vector<8x2048xf32>
    %cst_5 = arith.constant dense<0.000000e+00> : vector<8xf32>
    %6 = vector.multi_reduction <add>, %5, %cst_5 [1] : vector<8x2048xf32> to vector<8xf32>
    %7 = vector.shape_cast %6 : vector<8xf32> to vector<8x1xf32>
    %cst_6 = arith.constant 4.8828125E-4 : f32
    %8 = vector.broadcast %cst_6 : f32 to vector<8x1xf32>
    %9 = arith.mulf %7, %8 : vector<8x1xf32>
    %10 = vector.broadcast %9 : vector<8x1xf32> to vector<8x2048xf32>
    %11 = arith.subf %5, %10 : vector<8x2048xf32>
    %12 = arith.mulf %11, %11 : vector<8x2048xf32>
    %cst_7 = arith.constant dense<0.000000e+00> : vector<8xf32>
    %13 = vector.multi_reduction <add>, %12, %cst_7 [1] : vector<8x2048xf32> to vector<8xf32>
    %14 = vector.shape_cast %13 : vector<8xf32> to vector<8x1xf32>
    %cst_8 = arith.constant 4.8828125E-4 : f32
    %15 = vector.broadcast %cst_8 : f32 to vector<8x1xf32>
    %16 = arith.mulf %14, %15 : vector<8x1xf32>
    %c0_9 = arith.constant 0 : index
    %c0_10 = arith.constant 0 : index
    %17 = vector.load %arg3[%c0_9, %c0_10] : memref<8x1xf32, #tpu.memory_space<vmem>>, vector<8x1xf32>
    %cst_11 = arith.constant 9.99999974E-6 : f32
    %18 = vector.broadcast %cst_11 : f32 to vector<8x1xf32>
    %19 = arith.addf %16, %18 : vector<8x1xf32>
    %20 = math.rsqrt %19 : vector<8x1xf32>
    %21 = arith.mulf %17, %20 : vector<8x1xf32>
    %22 = vector.broadcast %21 : vector<8x1xf32> to vector<8x2048xf32>
    %23 = arith.mulf %11, %22 : vector<8x2048xf32>
    %c0_12 = arith.constant 0 : index
    %c0_13 = arith.constant 0 : index
    %24 = vector.load %arg4[%c0_12, %c0_13] : memref<8x1xf32, #tpu.memory_space<vmem>>, vector<8x1xf32>
    %25 = vector.broadcast %24 : vector<8x1xf32> to vector<8x2048xf32>
    %26 = arith.addf %23, %25 : vector<8x2048xf32>
    %cst_14 = arith.constant 0.000000e+00 : f32
    %27 = vector.broadcast %cst_14 : f32 to vector<8x2048xf32>
    %28 = arith.cmpf oge, %26, %27 : vector<8x2048xf32>
    %cst_15 = arith.constant 2.000000e-01 : f32
    %29 = vector.broadcast %cst_15 : f32 to vector<8x2048xf32>
    %30 = arith.mulf %29, %26 : vector<8x2048xf32>
    %31 = arith.select %28, %26, %30 : vector<8x2048xi1>, vector<8x2048xf32>
    %32 = vector.extract_strided_slice %31 {offsets = [0, 0], sizes = [8, 1024], strides = [1, 1]} : vector<8x2048xf32> to vector<8x1024xf32>
    %c0_16 = arith.constant 0 : index
    %c0_17 = arith.constant 0 : index
    %c0_18 = arith.constant 0 : index
    %33 = vector.load %arg5[%c0_16, %c0_17, %c0_18] : memref<2x8x1024xf32, #tpu.memory_space<vmem>>, vector<1x8x1024xf32>
    %34 = vector.shape_cast %33 : vector<1x8x1024xf32> to vector<8x1024xf32>
    %35 = vector.shape_cast %32 : vector<8x1024xf32> to vector<1x8x1024xf32>
    tpu.vector_store %arg5[%c0_16, %c0_17, %c0_18], %35 {strides = array<i32>} : memref<2x8x1024xf32, #tpu.memory_space<vmem>>, vector<1x8x1024xf32>,
    %36 = vector.extract_strided_slice %31 {offsets = [0, 1024], sizes = [8, 1024], strides = [1, 1]} : vector<8x2048xf32> to vector<8x1024xf32>
    %c1 = arith.constant 1 : index
    %c0_19 = arith.constant 0 : index
    %c0_20 = arith.constant 0 : index
    %37 = vector.load %arg5[%c1, %c0_19, %c0_20] : memref<2x8x1024xf32, #tpu.memory_space<vmem>>, vector<1x8x1024xf32>
    %38 = vector.shape_cast %37 : vector<1x8x1024xf32> to vector<8x1024xf32>
    %39 = vector.shape_cast %36 : vector<8x1024xf32> to vector<1x8x1024xf32>
    tpu.vector_store %arg5[%c1, %c0_19, %c0_20], %39 {strides = array<i32>} : memref<2x8x1024xf32, #tpu.memory_space<vmem>>, vector<1x8x1024xf32>,
    return
  }
}

</mosaic_0001>

<llo_original>
// kernel: tpu_custom_call.1
$region0: #{tpu_custom_call.1}
  #allocation0 [shape = 'u32[]', space=smem, size = 0x4, offset = 0x4, fixed_abs, tag = 'smem constant byte address 0x4 - core index']
  #allocation1 [shape = 'u32[144,128]{1,0:T(1,128)}', space=vmem, size = 0x12000, scoped, tag = 'internal scratch']
  %s0 = inlined_call_operand.vmem [shape: f32[8,36], index: 0, kind: input, shape index: {}]
  %s1 = inlined_call_operand.hbm [shape: f32[36,2048], index: 1, kind: input, shape index: {}]
  %s2 = inlined_call_operand.vmem [shape: f32[8,1], index: 2, kind: input, shape index: {}]
  %s3 = inlined_call_operand.vmem [shape: f32[8,1], index: 3, kind: input, shape index: {}]
  %s4 = inlined_call_operand.vmem [shape: f32[8,1], index: 4, kind: input, shape index: {}]
  %s5 = inlined_call_operand.hbm [shape: f32[2,8,1024], index: 5, kind: output, shape index: {}]
  %s6 = sld [smem:[#allocation0]]
  $region34: #{tpu_custom_call.1} parent=0
    _
  %s8 = ssub.s32 1, %s6
  %s9 = scalar_select 0, %s8, %s6
  $region1: #{tpu_custom_call.1} parent=0
    #allocation2 [shape = 'u8[327680]{0}', space=vmem, size = 0x50000, scoped, tag = 'input window, operand 1, single buffered']
    #allocation3 [shape = 's32[1]{0}', space=sflag, size = 0x4, scoped, tag = 'scoped memory for tpu_custom_call.1']
    #allocation4 [shape = 's32[1]{0}', space=sflag, size = 0x4, scoped, tag = 'scoped memory for tpu_custom_call.1']
    #allocation5 [shape = 'u8[65536]{0}', space=vmem, size = 0x10000, scoped, tag = 'output window, operand 0, single buffered']
    %10 = vsyncpa [#allocation3], 0
    %11 = vsyncpa [#allocation4], 0
    // Predicated region
    $region2: #{tpu_custom_call.1} parent=1 // pred_check
      _
    $region3: #{tpu_custom_call.1} parent=1 // pred_check_branch
      %13 = sbr.rel (0) target = $region5
    $region4: #{tpu_custom_call.1} parent=1 // pred_region
      _
    $region5: #{tpu_custom_call.1} parent=1 // pred_fallthru
      _
    // Predicated region
    $region6: #{tpu_custom_call.1} parent=1 // pred_check
      _
    $region7: #{tpu_custom_call.1} parent=1 // pred_check_branch
      %15 = sbr.rel (0) target = $region9
    $region8: #{tpu_custom_call.1} parent=1 // pred_region
      %s17 = ssub.s32 10240, 10240
      %18 = vsyncadd [#allocation3], %s17
      %s19 = sshll.u32 [#allocation2], 4
      %s20 = int_to_ptr.vmem [resolvable:$true] %s19
      %25 = dma.hbm_to_vmem [thread:$0]  %s1, 10240, %s20, [#allocation3], 2048, 2048, 128
    $region9: #{tpu_custom_call.1} parent=1 // pred_fallthru
      _
    // Predicated region
    $region10: #{tpu_custom_call.1} parent=1 // pred_check
      _
    $region11: #{tpu_custom_call.1} parent=1 // pred_check_branch
      %27 = sbr.rel (0) target = $region13
    $region12: #{tpu_custom_call.1} parent=1 // pred_region
      _
    $region13: #{tpu_custom_call.1} parent=1 // pred_fallthru
      _
    // Predicated region
    $region14: #{tpu_custom_call.1} parent=1 // pred_check
      _
    $region15: #{tpu_custom_call.1} parent=1 // pred_check_branch
      %29 = sbr.rel (0) target = $region17
    $region16: #{tpu_custom_call.1} parent=1 // pred_region
      _
    $region17: #{tpu_custom_call.1} parent=1 // pred_fallthru
      _
    // Predicated region
    $region18: #{tpu_custom_call.1} parent=1 // pred_check
      _
    $region19: #{tpu_custom_call.1} parent=1 // pred_check_branch
      %31 = sbr.rel (0) target = $region21
    $region20: #{tpu_custom_call.1} parent=1 // pred_region
      _
    $region21: #{tpu_custom_call.1} parent=1 // pred_fallthru
      _
    // Predicated region
    $region22: #{tpu_custom_call.1} parent=1 // pred_check
      _
    $region23: #{tpu_custom_call.1} parent=1 // pred_check_branch
      %33 = sbr.rel (0) target = $region25
    $region24: #{tpu_custom_call.1} parent=1 // pred_region
      %34 = dma.done [#allocation3], 10240
    $region25: #{tpu_custom_call.1} parent=1 // pred_fallthru
      _
    %v35 = vld [vmem:[%s0] sm:$0xff]
    %v36 = vld [vmem:[#allocation2] sm:$0xff]
    %v37 = vld [vmem:[#allocation2 + $0x8] sm:$0xff]
    %v38 = vld [vmem:[#allocation2 + $0x10] sm:$0xff]
    %v39 = vld [vmem:[#allocation2 + $0x18] sm:$0xff]
    %v40 = vld [vmem:[#allocation2 + $0x20] sm:$0xff]
    %v41 = vld [vmem:[#allocation2 + $0x28] sm:$0xff]
    %v42 = vld [vmem:[#allocation2 + $0x30] sm:$0xff]
    %v43 = vld [vmem:[#allocation2 + $0x38] sm:$0xff]
    %v44 = vld [vmem:[#allocation2 + $0x40] sm:$0xff]
    %v45 = vld [vmem:[#allocation2 + $0x48] sm:$0xff]
    %v46 = vld [vmem:[#allocation2 + $0x50] sm:$0xff]
    %v47 = vld [vmem:[#allocation2 + $0x58] sm:$0xff]
    %v48 = vld [vmem:[#allocation2 + $0x60] sm:$0xff]
    %v49 = vld [vmem:[#allocation2 + $0x68] sm:$0xff]
    %v50 = vld [vmem:[#allocation2 + $0x70] sm:$0xff]
    %v51 = vld [vmem:[#allocation2 + $0x78] sm:$0xff]
    %v52 = vld [vmem:[#allocation2 + $0x80] sm:$0xff]
    %v53 = vld [vmem:[#allocation2 + $0x88] sm:$0xff]
    %v54 = vld [vmem:[#allocation2 + $0x90] sm:$0xff]
    %v55 = vld [vmem:[#allocation2 + $0x98] sm:$0xff]
    %v56 = vld [vmem:[#allocation2 + $0xa0] sm:$0xff]
    %v57 = vld [vmem:[#allocation2 + $0xa8] sm:$0xff]
    %v58 = vld [vmem:[#allocation2 + $0xb0] sm:$0xff]
    %v59 = vld [vmem:[#allocation2 + $0xb8] sm:$0xff]
    %v60 = vld [vmem:[#allocation2 + $0xc0] sm:$0xff]
    %v61 = vld [vmem:[#allocation2 + $0xc8] sm:$0xff]
    %v62 = vld [vmem:[#allocation2 + $0xd0] sm:$0xff]
    %v63 = vld [vmem:[#allocation2 + $0xd8] sm:$0xff]
    %v64 = vld [vmem:[#allocation2 + $0xe0] sm:$0xff]
    %v65 = vld [vmem:[#allocation2 + $0xe8] sm:$0xff]
    %v66 = vld [vmem:[#allocation2 + $0xf0] sm:$0xff]
    %v67 = vld [vmem:[#allocation2 + $0xf8] sm:$0xff]
    %v68 = vld [vmem:[#allocation2 + $0x100] sm:$0xff]
    %v69 = vld [vmem:[#allocation2 + $0x108] sm:$0xff]
    %v70 = vld [vmem:[#allocation2 + $0x110] sm:$0xff]
    %v71 = vld [vmem:[#allocation2 + $0x118] sm:$0xff]
    %v72 = vld [vmem:[#allocation2 + $0x120] sm:$0xff]
    %v73 = vld [vmem:[#allocation2 + $0x128] sm:$0xff]
    %v74 = vld [vmem:[#allocation2 + $0x130] sm:$0xff]
    %v75 = vld [vmem:[#allocation2 + $0x138] sm:$0xff]
    %v76 = vld [vmem:[#allocation2 + $0x140] sm:$0xff]
    %v77 = vld [vmem:[#allocation2 + $0x148] sm:$0xff]
    %v78 = vld [vmem:[#allocation2 + $0x150] sm:$0xff]
    %v79 = vld [vmem:[#allocation2 + $0x158] sm:$0xff]
    %v80 = vld [vmem:[#allocation2 + $0x160] sm:$0xff]
    %v81 = vld [vmem:[#allocation2 + $0x168] sm:$0xff]
    %v82 = vld [vmem:[#allocation2 + $0x170] sm:$0xff]
    %v83 = vld [vmem:[#allocation2 + $0x178] sm:$0xff]
    %v84 = vld [vmem:[#allocation2 + $0x180] sm:$0xff]
    %v85 = vld [vmem:[#allocation2 + $0x188] sm:$0xff]
    %v86 = vld [vmem:[#allocation2 + $0x190] sm:$0xff]
    %v87 = vld [vmem:[#allocation2 + $0x198] sm:$0xff]
    %v88 = vld [vmem:[#allocation2 + $0x1a0] sm:$0xff]
    %v89 = vld [vmem:[#allocation2 + $0x1a8] sm:$0xff]
    %v90 = vld [vmem:[#allocation2 + $0x1b0] sm:$0xff]
    %v91 = vld [vmem:[#allocation2 + $0x1b8] sm:$0xff]
    %v92 = vld [vmem:[#allocation2 + $0x1c0] sm:$0xff]
    %v93 = vld [vmem:[#allocation2 + $0x1c8] sm:$0xff]
    %v94 = vld [vmem:[#allocation2 + $0x1d0] sm:$0xff]
    %v95 = vld [vmem:[#allocation2 + $0x1d8] sm:$0xff]
    %v96 = vld [vmem:[#allocation2 + $0x1e0] sm:$0xff]
    %v97 = vld [vmem:[#allocation2 + $0x1e8] sm:$0xff]
    %v98 = vld [vmem:[#allocation2 + $0x1f0] sm:$0xff]
    %v99 = vld [vmem:[#allocation2 + $0x1f8] sm:$0xff]
    %v100 = vld [vmem:[#allocation2 + $0x200] sm:$0xf]
    %v101 = vld [vmem:[#allocation2 + $0x208] sm:$0xf]
    %v102 = vld [vmem:[#allocation2 + $0x210] sm:$0xf]
    %v103 = vld [vmem:[#allocation2 + $0x218] sm:$0xf]
    %v104 = vld [vmem:[#allocation2 + $0x220] sm:$0xf]
    %v105 = vld [vmem:[#allocation2 + $0x228] sm:$0xf]
    %v106 = vld [vmem:[#allocation2 + $0x230] sm:$0xf]
    %v107 = vld [vmem:[#allocation2 + $0x238] sm:$0xf]
    %v108 = vld [vmem:[#allocation2 + $0x240] sm:$0xf]
    %v109 = vld [vmem:[#allocation2 + $0x248] sm:$0xf]
    %v110 = vld [vmem:[#allocation2 + $0x250] sm:$0xf]
    %v111 = vld [vmem:[#allocation2 + $0x258] sm:$0xf]
    %v112 = vld [vmem:[#allocation2 + $0x260] sm:$0xf]
    %v113 = vld [vmem:[#allocation2 + $0x268] sm:$0xf]
    %v114 = vld [vmem:[#allocation2 + $0x270] sm:$0xf]
    %v115 = vld [vmem:[#allocation2 + $0x278] sm:$0xf]
    %v116 = vld [vmem:[%s2] sm:$0xff]
    %118 = vset.pattern.permute.xlu0 0
    %119 = vperm.xlu0 %118, %v116
    %v120 = vpop.permute.xlu0 %119
    %vm122 = vcmask 293888
    %v124 = vsel %vm122, %v35, 0
    %vm126 = vcmask 1043456
    %v128 = vsel %vm126, %v100, 0
    %v131 = vsel %vm126, %v101, 0
    %v134 = vsel %vm126, %v102, 0
    %v137 = vsel %vm126, %v103, 0
    %v140 = vsel %vm126, %v104, 0
    %v143 = vsel %vm126, %v105, 0
    %v146 = vsel %vm126, %v106, 0
    %v149 = vsel %vm126, %v107, 0
    %v152 = vsel %vm126, %v108, 0
    %v155 = vsel %vm126, %v109, 0
    %v158 = vsel %vm126, %v110, 0
    %v161 = vsel %vm126, %v111, 0
    %v164 = vsel %vm126, %v112, 0
    %v167 = vsel %vm126, %v113, 0
    %v170 = vsel %vm126, %v114, 0
    %v173 = vsel %vm126, %v115, 0
    %175 = vmatprep.subr.mxu0 0.0
    %176 = vmatpush1.msra.mxu0 0.0
    %177 = vmatprep.subr.mxu0 0.0
    %178 = vmatpush1.msra.mxu0 0.0
    %179 = vmatprep.subr.mxu0 0.0
    %180 = vmatpush1.msra.mxu0 0.0
    %181 = vmatprep.subr.mxu0 0.0
    %182 = vmatpush1.msra.mxu0 0.0
    %183 = vmatprep.subr.mxu0 0.0
    %184 = vmatpush1.msra.mxu0 0.0
    %185 = vmatprep.subr.mxu0 0.0
    %186 = vmatpush1.msra.mxu0 0.0
    %187 = vmatprep.subr.mxu0 0.0
    %188 = vmatpush1.msra.mxu0 0.0
    %189 = vmatprep.subr.mxu0 0.0
    %190 = vmatpush1.msra.mxu0 0.0
    %191 = vmatprep.subr.mxu0 0.0
    %192 = vmatpush1.msra.mxu0 0.0
    %193 = vmatprep.subr.mxu0 0.0
    %194 = vmatpush1.msra.mxu0 0.0
    %195 = vmatprep.subr.mxu0 0.0
    %196 = vmatpush1.msra.mxu0 0.0
    %197 = vmatprep.subr.mxu0 %v131
    %198 = vmatpush1.msra.mxu0 %v128
    %199 = vmatprep.subr.mxu0 %v85
    %200 = vmatpush1.msra.mxu0 %v84
    %201 = vmatprep.subr.mxu0 %v69
    %202 = vmatpush1.msra.mxu0 %v68
    %203 = vmatprep.subr.mxu0 %v53
    %204 = vmatpush1.msra.mxu0 %v52
    %205 = vmatprep.subr.mxu0 %v37
    %206 = vmatpush1.msra.mxu0 %v36
    %207 = vmatprep.subr.mxu0 0.0
    %208 = vmatpush2.msra.mxu0 0.0
    %209 = vmatprep.subr.mxu0 0.0
    %210 = vmatpush2.msra.mxu0 0.0
    %211 = vmatprep.subr.mxu0 0.0
    %212 = vmatpush2.msra.mxu0 0.0
    %213 = vmatprep.subr.mxu0 0.0
    %214 = vmatpush2.msra.mxu0 0.0
    %215 = vmatprep.subr.mxu0 0.0
    %216 = vmatpush2.msra.mxu0 0.0
    %217 = vmatprep.subr.mxu0 0.0
    %218 = vmatpush2.msra.mxu0 0.0
    %219 = vmatprep.subr.mxu0 0.0
    %220 = vmatpush2.msra.mxu0 0.0
    %221 = vmatprep.subr.mxu0 0.0
    %222 = vmatpush2.msra.mxu0 0.0
    %223 = vmatprep.subr.mxu0 0.0
    %224 = vmatpush2.msra.mxu0 0.0
    %225 = vmatprep.subr.mxu0 0.0
    %226 = vmatpush2.msra.mxu0 0.0
    %227 = vmatprep.subr.mxu0 0.0
    %228 = vmatpush2.msra.mxu0 0.0
    %229 = vmatprep.subr.mxu0 0.0
    %230 = vmatpush2.msra.mxu0 0.0
    %231 = vmatprep.subr.mxu0 0.0
    %232 = vmatpush2.msra.mxu0 0.0
    %233 = vmatprep.subr.mxu0 0.0
    %234 = vmatpush2.msra.mxu0 0.0
    %235 = vmatprep.subr.mxu0 0.0
    %236 = vmatpush2.msra.mxu0 0.0
    %237 = vmatprep.subr.mxu0 0.0
    %238 = vmatpush2.msra.mxu0 0.0
    %239 = vmatprep.mubr.f32.mxu0 0.0
    %240 = vmatmul.mubr.f32.gmra.mxu0 %v124
    %v241 = vpop.f32.mrf.mxu0
    %v242 = vadd.f32 %v120, %v241
    %v243 = vpop.f32.mrf.mxu0
    %v244 = vadd.f32 %v120, %v243
    %245 = vdwg.mxu0
    %246 = vmatprep.subr.mxu0 0.0
    %247 = vmatpush1.msra.mxu0 0.0
    %248 = vmatprep.subr.mxu0 0.0
    %249 = vmatpush1.msra.mxu0 0.0
    %250 = vmatprep.subr.mxu0 0.0
    %251 = vmatpush1.msra.mxu0 0.0
    %252 = vmatprep.subr.mxu0 0.0
    %253 = vmatpush1.msra.mxu0 0.0
    %254 = vmatprep.subr.mxu0 0.0
    %255 = vmatpush1.msra.mxu0 0.0
    %256 = vmatprep.subr.mxu0 0.0
    %257 = vmatpush1.msra.mxu0 0.0
    %258 = vmatprep.subr.mxu0 0.0
    %259 = vmatpush1.msra.mxu0 0.0
    %260 = vmatprep.subr.mxu0 0.0
    %261 = vmatpush1.msra.mxu0 0.0
    %262 = vmatprep.subr.mxu0 0.0
    %263 = vmatpush1.msra.mxu0 0.0
    %264 = vmatprep.subr.mxu0 0.0
    %265 = vmatpush1.msra.mxu0 0.0
    %266 = vmatprep.subr.mxu0 0.0
    %267 = vmatpush1.msra.mxu0 0.0
    %268 = vmatprep.subr.mxu0 %v137
    %269 = vmatpush1.msra.mxu0 %v134
    %270 = vmatprep.subr.mxu0 %v87
    %271 = vmatpush1.msra.mxu0 %v86
    %272 = vmatprep.subr.mxu0 %v71
    %273 = vmatpush1.msra.mxu0 %v70
    %274 = vmatprep.subr.mxu0 %v55
    %275 = vmatpush1.msra.mxu0 %v54
    %276 = vmatprep.subr.mxu0 %v39
    %277 = vmatpush1.msra.mxu0 %v38
    %278 = vmatprep.subr.mxu0 0.0
    %279 = vmatpush2.msra.mxu0 0.0
    %280 = vmatprep.subr.mxu0 0.0
    %281 = vmatpush2.msra.mxu0 0.0
    %282 = vmatprep.subr.mxu0 0.0
    %283 = vmatpush2.msra.mxu0 0.0
    %284 = vmatprep.subr.mxu0 0.0
    %285 = vmatpush2.msra.mxu0 0.0
    %286 = vmatprep.subr.mxu0 0.0
    %287 = vmatpush2.msra.mxu0 0.0
    %288 = vmatprep.subr.mxu0 0.0
    %289 = vmatpush2.msra.mxu0 0.0
    %290 = vmatprep.subr.mxu0 0.0
    %291 = vmatpush2.msra.mxu0 0.0
    %292 = vmatprep.subr.mxu0 0.0
    %293 = vmatpush2.msra.mxu0 0.0
    %294 = vmatprep.subr.mxu0 0.0
    %295 = vmatpush2.msra.mxu0 0.0
    %296 = vmatprep.subr.mxu0 0.0
    %297 = vmatpush2.msra.mxu0 0.0
    %298 = vmatprep.subr.mxu0 0.0
    %299 = vmatpush2.msra.mxu0 0.0
    %300 = vmatprep.subr.mxu0 0.0
    %301 = vmatpush2.msra.mxu0 0.0
    %302 = vmatprep.subr.mxu0 0.0
    %303 = vmatpush2.msra.mxu0 0.0
    %304 = vmatprep.subr.mxu0 0.0
    %305 = vmatpush2.msra.mxu0 0.0
    %306 = vmatprep.subr.mxu0 0.0
    %307 = vmatpush2.msra.mxu0 0.0
    %308 = vmatprep.subr.mxu0 0.0
    %309 = vmatpush2.msra.mxu0 0.0
    %310 = vmatprep.mubr.f32.mxu0 0.0
    %311 = vmatmul.mubr.f32.gmra.mxu0 %v124
    %v312 = vpop.f32.mrf.mxu0
    %v313 = vadd.f32 %v120, %v312
    %v314 = vpop.f32.mrf.mxu0
    %v315 = vadd.f32 %v120, %v314
    %316 = vdwg.mxu0
    %317 = vmatprep.subr.mxu0 0.0
    %318 = vmatpush1.msra.mxu0 0.0
    %319 = vmatprep.subr.mxu0 0.0
    %320 = vmatpush1.msra.mxu0 0.0
    %321 = vmatprep.subr.mxu0 0.0
    %322 = vmatpush1.msra.mxu0 0.0
    %323 = vmatprep.subr.mxu0 0.0
    %324 = vmatpush1.msra.mxu0 0.0
    %325 = vmatprep.subr.mxu0 0.0
    %326 = vmatpush1.msra.mxu0 0.0
    %327 = vmatprep.subr.mxu0 0.0
    %328 = vmatpush1.msra.mxu0 0.0
    %329 = vmatprep.subr.mxu0 0.0
    %330 = vmatpush1.msra.mxu0 0.0
    %331 = vmatprep.subr.mxu0 0.0
    %332 = vmatpush1.msra.mxu0 0.0
    %333 = vmatprep.subr.mxu0 0.0
    %334 = vmatpush1.msra.mxu0 0.0
    %335 = vmatprep.subr.mxu0 0.0
    %336 = vmatpush1.msra.mxu0 0.0
    %337 = vmatprep.subr.mxu0 0.0
    %338 = vmatpush1.msra.mxu0 0.0
    %339 = vmatprep.subr.mxu0 %v143
    %340 = vmatpush1.msra.mxu0 %v140
    %341 = vmatprep.subr.mxu0 %v89
    %342 = vmatpush1.msra.mxu0 %v88
    %343 = vmatprep.subr.mxu0 %v73
    %344 = vmatpush1.msra.mxu0 %v72
    %345 = vmatprep.subr.mxu0 %v57
    %346 = vmatpush1.msra.mxu0 %v56
    %347 = vmatprep.subr.mxu0 %v41
    %348 = vmatpush1.msra.mxu0 %v40
    %349 = vmatprep.subr.mxu0 0.0
    %350 = vmatpush2.msra.mxu0 0.0
    %351 = vmatprep.subr.mxu0 0.0
    %352 = vmatpush2.msra.mxu0 0.0
    %353 = vmatprep.subr.mxu0 0.0
    %354 = vmatpush2.msra.mxu0 0.0
    %355 = vmatprep.subr.mxu0 0.0
    %356 = vmatpush2.msra.mxu0 0.0
    %357 = vmatprep.subr.mxu0 0.0
    %358 = vmatpush2.msra.mxu0 0.0
    %359 = vmatprep.subr.mxu0 0.0
    %360 = vmatpush2.msra.mxu0 0.0
    %361 = vmatprep.subr.mxu0 0.0
    %362 = vmatpush2.msra.mxu0 0.0
    %363 = vmatprep.subr.mxu0 0.0
    %364 = vmatpush2.msra.mxu0 0.0
    %365 = vmatprep.subr.mxu0 0.0
    %366 = vmatpush2.msra.mxu0 0.0
    %367 = vmatprep.subr.mxu0 0.0
    %368 = vmatpush2.msra.mxu0 0.0
    %369 = vmatprep.subr.mxu0 0.0
    %370 = vmatpush2.msra.mxu0 0.0
    %371 = vmatprep.subr.mxu0 0.0
    %372 = vmatpush2.msra.mxu0 0.0
    %373 = vmatprep.subr.mxu0 0.0
    %374 = vmatpush2.msra.mxu0 0.0
    %375 = vmatprep.subr.mxu0 0.0
    %376 = vmatpush2.msra.mxu0 0.0
    %377 = vmatprep.subr.mxu0 0.0
    %378 = vmatpush2.msra.mxu0 0.0
    %379 = vmatprep.subr.mxu0 0.0
    %380 = vmatpush2.msra.mxu0 0.0
    %381 = vmatprep.mubr.f32.mxu0 0.0
    %382 = vmatmul.mubr.f32.gmra.mxu0 %v124
    %v383 = vpop.f32.mrf.mxu0
    %v384 = vadd.f32 %v120, %v383
    %v385 = vpop.f32.mrf.mxu0
    %v386 = vadd.f32 %v120, %v385
    %387 = vdwg.mxu0
    %388 = vmatprep.subr.mxu0 0.0
    %389 = vmatpush1.msra.mxu0 0.0
    %390 = vmatprep.subr.mxu0 0.0
    %391 = vmatpush1.msra.mxu0 0.0
    %392 = vmatprep.subr.mxu0 0.0
    %393 = vmatpush1.msra.mxu0 0.0
    %394 = vmatprep.subr.mxu0 0.0
    %395 = vmatpush1.msra.mxu0 0.0
    %396 = vmatprep.subr.mxu0 0.0
    %397 = vmatpush1.msra.mxu0 0.0
    %398 = vmatprep.subr.mxu0 0.0
    %399 = vmatpush1.msra.mxu0 0.0
    %400 = vmatprep.subr.mxu0 0.0
    %401 = vmatpush1.msra.mxu0 0.0
    %402 = vmatprep.subr.mxu0 0.0
    %403 = vmatpush1.msra.mxu0 0.0
    %404 = vmatprep.subr.mxu0 0.0
    %405 = vmatpush1.msra.mxu0 0.0
    %406 = vmatprep.subr.mxu0 0.0
    %407 = vmatpush1.msra.mxu0 0.0
    %408 = vmatprep.subr.mxu0 0.0
    %409 = vmatpush1.msra.mxu0 0.0
    %410 = vmatprep.subr.mxu0 %v149
    %411 = vmatpush1.msra.mxu0 %v146
    %412 = vmatprep.subr.mxu0 %v91
    %413 = vmatpush1.msra.mxu0 %v90
    %414 = vmatprep.subr.mxu0 %v75
    %415 = vmatpush1.msra.mxu0 %v74
    %416 = vmatprep.subr.mxu0 %v59
    %417 = vmatpush1.msra.mxu0 %v58
    %418 = vmatprep.subr.mxu0 %v43
    %419 = vmatpush1.msra.mxu0 %v42
    %420 = vmatprep.subr.mxu0 0.0
    %421 = vmatpush2.msra.mxu0 0.0
    %422 = vmatprep.subr.mxu0 0.0
    %423 = vmatpush2.msra.mxu0 0.0
    %424 = vmatprep.subr.mxu0 0.0
    %425 = vmatpush2.msra.mxu0 0.0
    %426 = vmatprep.subr.mxu0 0.0
    %427 = vmatpush2.msra.mxu0 0.0
    %428 = vmatprep.subr.mxu0 0.0
    %429 = vmatpush2.msra.mxu0 0.0
    %430 = vmatprep.subr.mxu0 0.0
    %431 = vmatpush2.msra.mxu0 0.0
    %432 = vmatprep.subr.mxu0 0.0
    %433 = vmatpush2.msra.mxu0 0.0
    %434 = vmatprep.subr.mxu0 0.0
    %435 = vmatpush2.msra.mxu0 0.0
    %436 = vmatprep.subr.mxu0 0.0
    %437 = vmatpush2.msra.mxu0 0.0
    %438 = vmatprep.subr.mxu0 0.0
    %439 = vmatpush2.msra.mxu0 0.0
    %440 = vmatprep.subr.mxu0 0.0
    %441 = vmatpush2.msra.mxu0 0.0
    %442 = vmatprep.subr.mxu0 0.0
    %443 = vmatpush2.msra.mxu0 0.0
    %444 = vmatprep.subr.mxu0 0.0
    %445 = vmatpush2.msra.mxu0 0.0
    %446 = vmatprep.subr.mxu0 0.0
    %447 = vmatpush2.msra.mxu0 0.0
    %448 = vmatprep.subr.mxu0 0.0
    %449 = vmatpush2.msra.mxu0 0.0
    %450 = vmatprep.subr.mxu0 0.0
    %451 = vmatpush2.msra.mxu0 0.0
    %452 = vmatprep.mubr.f32.mxu0 0.0
    %453 = vmatmul.mubr.f32.gmra.mxu0 %v124
    %v454 = vpop.f32.mrf.mxu0
    %v455 = vadd.f32 %v120, %v454
    %v456 = vpop.f32.mrf.mxu0
    %v457 = vadd.f32 %v120, %v456
    %458 = vdwg.mxu0
    %459 = vmatprep.subr.mxu0 0.0
    %460 = vmatpush1.msra.mxu0 0.0
    %461 = vmatprep.subr.mxu0 0.0
    %462 = vmatpush1.msra.mxu0 0.0
    %463 = vmatprep.subr.mxu0 0.0
    %464 = vmatpush1.msra.mxu0 0.0
    %465 = vmatprep.subr.mxu0 0.0
    %466 = vmatpush1.msra.mxu0 0.0
    %467 = vmatprep.subr.mxu0 0.0
    %468 = vmatpush1.msra.mxu0 0.0
    %469 = vmatprep.subr.mxu0 0.0
    %470 = vmatpush1.msra.mxu0 0.0
    %471 = vmatprep.subr.mxu0 0.0
    %472 = vmatpush1.msra.mxu0 0.0
    %473 = vmatprep.subr.mxu0 0.0
    %474 = vmatpush1.msra.mxu0 0.0
    %475 = vmatprep.subr.mxu0 0.0
    %476 = vmatpush1.msra.mxu0 0.0
    %477 = vmatprep.subr.mxu0 0.0
    %478 = vmatpush1.msra.mxu0 0.0
    %479 = vmatprep.subr.mxu0 0.0
    %480 = vmatpush1.msra.mxu0 0.0
    %481 = vmatprep.subr.mxu0 %v155
    %482 = vmatpush1.msra.mxu0 %v152
    %483 = vmatprep.subr.mxu0 %v93
    %484 = vmatpush1.msra.mxu0 %v92
    %485 = vmatprep.subr.mxu0 %v77
    %486 = vmatpush1.msra.mxu0 %v76
    %487 = vmatprep.subr.mxu0 %v61
    %488 = vmatpush1.msra.mxu0 %v60
    %489 = vmatprep.subr.mxu0 %v45
    %490 = vmatpush1.msra.mxu0 %v44
    %491 = vmatprep.subr.mxu0 0.0
    %492 = vmatpush2.msra.mxu0 0.0
    %493 = vmatprep.subr.mxu0 0.0
    %494 = vmatpush2.msra.mxu0 0.0
    %495 = vmatprep.subr.mxu0 0.0
    %496 = vmatpush2.msra.mxu0 0.0
    %497 = vmatprep.subr.mxu0 0.0
    %498 = vmatpush2.msra.mxu0 0.0
    %499 = vmatprep.subr.mxu0 0.0
    %500 = vmatpush2.msra.mxu0 0.0
    %501 = vmatprep.subr.mxu0 0.0
    %502 = vmatpush2.msra.mxu0 0.0
    %503 = vmatprep.subr.mxu0 0.0
    %504 = vmatpush2.msra.mxu0 0.0
    %505 = vmatprep.subr.mxu0 0.0
    %506 = vmatpush2.msra.mxu0 0.0
    %507 = vmatprep.subr.mxu0 0.0
    %508 = vmatpush2.msra.mxu0 0.0
    %509 = vmatprep.subr.mxu0 0.0
    %510 = vmatpush2.msra.mxu0 0.0
    %511 = vmatprep.subr.mxu0 0.0
    %512 = vmatpush2.msra.mxu0 0.0
    %513 = vmatprep.subr.mxu0 0.0
    %514 = vmatpush2.msra.mxu0 0.0
    %515 = vmatprep.subr.mxu0 0.0
    %516 = vmatpush2.msra.mxu0 0.0
    %517 = vmatprep.subr.mxu0 0.0
    %518 = vmatpush2.msra.mxu0 0.0
    %519 = vmatprep.subr.mxu0 0.0
    %520 = vmatpush2.msra.mxu0 0.0
    %521 = vmatprep.subr.mxu0 0.0
    %522 = vmatpush2.msra.mxu0 0.0
    %523 = vmatprep.mubr.f32.mxu0 0.0
    %524 = vmatmul.mubr.f32.gmra.mxu0 %v124
    %v525 = vpop.f32.mrf.mxu0
    %v526 = vadd.f32 %v120, %v525
    %v527 = vpop.f32.mrf.mxu0
    %v528 = vadd.f32 %v120, %v527
    %529 = vdwg.mxu0
    %530 = vmatprep.subr.mxu0 0.0
    %531 = vmatpush1.msra.mxu0 0.0
    %532 = vmatprep.subr.mxu0 0.0
    %533 = vmatpush1.msra.mxu0 0.0
    %534 = vmatprep.subr.mxu0 0.0
    %535 = vmatpush1.msra.mxu0 0.0
    %536 = vmatprep.subr.mxu0 0.0
    %537 = vmatpush1.msra.mxu0 0.0
    %538 = vmatprep.subr.mxu0 0.0
    %539 = vmatpush1.msra.mxu0 0.0
    %540 = vmatprep.subr.mxu0 0.0
    %541 = vmatpush1.msra.mxu0 0.0
    %542 = vmatprep.subr.mxu0 0.0
    %543 = vmatpush1.msra.mxu0 0.0
    %544 = vmatprep.subr.mxu0 0.0
    %545 = vmatpush1.msra.mxu0 0.0
    %546 = vmatprep.subr.mxu0 0.0
    %547 = vmatpush1.msra.mxu0 0.0
    %548 = vmatprep.subr.mxu0 0.0
    %549 = vmatpush1.msra.mxu0 0.0
    %550 = vmatprep.subr.mxu0 0.0
    %551 = vmatpush1.msra.mxu0 0.0
    %552 = vmatprep.subr.mxu0 %v161
    %553 = vmatpush1.msra.mxu0 %v158
    %554 = vmatprep.subr.mxu0 %v95
    %555 = vmatpush1.msra.mxu0 %v94
    %556 = vmatprep.subr.mxu0 %v79
    %557 = vmatpush1.msra.mxu0 %v78
    %558 = vmatprep.subr.mxu0 %v63
    %559 = vmatpush1.msra.mxu0 %v62
    %560 = vmatprep.subr.mxu0 %v47
    %561 = vmatpush1.msra.mxu0 %v46
    %562 = vmatprep.subr.mxu0 0.0
    %563 = vmatpush2.msra.mxu0 0.0
    %564 = vmatprep.subr.mxu0 0.0
    %565 = vmatpush2.msra.mxu0 0.0
    %566 = vmatprep.subr.mxu0 0.0
    %567 = vmatpush2.msra.mxu0 0.0
    %568 = vmatprep.subr.mxu0 0.0
    %569 = vmatpush2.msra.mxu0 0.0
    %570 = vmatprep.subr.mxu0 0.0
    %571 = vmatpush2.msra.mxu0 0.0
    %572 = vmatprep.subr.mxu0 0.0
    %573 = vmatpush2.msra.mxu0 0.0
    %574 = vmatprep.subr.mxu0 0.0
    %575 = vmatpush2.msra.mxu0 0.0
    %576 = vmatprep.subr.mxu0 0.0
    %577 = vmatpush2.msra.mxu0 0.0
    %578 = vmatprep.subr.mxu0 0.0
    %579 = vmatpush2.msra.mxu0 0.0
    %580 = vmatprep.subr.mxu0 0.0
    %581 = vmatpush2.msra.mxu0 0.0
    %582 = vmatprep.subr.mxu0 0.0
    %583 = vmatpush2.msra.mxu0 0.0
    %584 = vmatprep.subr.mxu0 0.0
    %585 = vmatpush2.msra.mxu0 0.0
    %586 = vmatprep.subr.mxu0 0.0
    %587 = vmatpush2.msra.mxu0 0.0
    %588 = vmatprep.subr.mxu0 0.0
    %589 = vmatpush2.msra.mxu0 0.0
    %590 = vmatprep.subr.mxu0 0.0
    %591 = vmatpush2.msra.mxu0 0.0
    %592 = vmatprep.subr.mxu0 0.0
    %593 = vmatpush2.msra.mxu0 0.0
    %594 = vmatprep.mubr.f32.mxu0 0.0
    %595 = vmatmul.mubr.f32.gmra.mxu0 %v124
    %v596 = vpop.f32.mrf.mxu0
    %v597 = vadd.f32 %v120, %v596
    %v598 = vpop.f32.mrf.mxu0
    %v599 = vadd.f32 %v120, %v598
    %600 = vdwg.mxu0
    %601 = vmatprep.subr.mxu0 0.0
    %602 = vmatpush1.msra.mxu0 0.0
    %603 = vmatprep.subr.mxu0 0.0
    %604 = vmatpush1.msra.mxu0 0.0
    %605 = vmatprep.subr.mxu0 0.0
    %606 = vmatpush1.msra.mxu0 0.0
    %607 = vmatprep.subr.mxu0 0.0
    %608 = vmatpush1.msra.mxu0 0.0
    %609 = vmatprep.subr.mxu0 0.0
    %610 = vmatpush1.msra.mxu0 0.0
    %611 = vmatprep.subr.mxu0 0.0
    %612 = vmatpush1.msra.mxu0 0.0
    %613 = vmatprep.subr.mxu0 0.0
    %614 = vmatpush1.msra.mxu0 0.0
    %615 = vmatprep.subr.mxu0 0.0
    %616 = vmatpush1.msra.mxu0 0.0
    %617 = vmatprep.subr.mxu0 0.0
    %618 = vmatpush1.msra.mxu0 0.0
    %619 = vmatprep.subr.mxu0 0.0
    %620 = vmatpush1.msra.mxu0 0.0
    %621 = vmatprep.subr.mxu0 0.0
    %622 = vmatpush1.msra.mxu0 0.0
    %623 = vmatprep.subr.mxu0 %v167
    %624 = vmatpush1.msra.mxu0 %v164
    %625 = vmatprep.subr.mxu0 %v97
    %626 = vmatpush1.msra.mxu0 %v96
    %627 = vmatprep.subr.mxu0 %v81
    %628 = vmatpush1.msra.mxu0 %v80
    %629 = vmatprep.subr.mxu0 %v65
    %630 = vmatpush1.msra.mxu0 %v64
    %631 = vmatprep.subr.mxu0 %v49
    %632 = vmatpush1.msra.mxu0 %v48
    %633 = vmatprep.subr.mxu0 0.0
    %634 = vmatpush2.msra.mxu0 0.0
    %635 = vmatprep.subr.mxu0 0.0
    %636 = vmatpush2.msra.mxu0 0.0
    %637 = vmatprep.subr.mxu0 0.0
    %638 = vmatpush2.msra.mxu0 0.0
    %639 = vmatprep.subr.mxu0 0.0
    %640 = vmatpush2.msra.mxu0 0.0
    %641 = vmatprep.subr.mxu0 0.0
    %642 = vmatpush2.msra.mxu0 0.0
    %643 = vmatprep.subr.mxu0 0.0
    %644 = vmatpush2.msra.mxu0 0.0
    %645 = vmatprep.subr.mxu0 0.0
    %646 = vmatpush2.msra.mxu0 0.0
    %647 = vmatprep.subr.mxu0 0.0
    %648 = vmatpush2.msra.mxu0 0.0
    %649 = vmatprep.subr.mxu0 0.0
    %650 = vmatpush2.msra.mxu0 0.0
    %651 = vmatprep.subr.mxu0 0.0
    %652 = vmatpush2.msra.mxu0 0.0
    %653 = vmatprep.subr.mxu0 0.0
    %654 = vmatpush2.msra.mxu0 0.0
    %655 = vmatprep.subr.mxu0 0.0
    %656 = vmatpush2.msra.mxu0 0.0
    %657 = vmatprep.subr.mxu0 0.0
    %658 = vmatpush2.msra.mxu0 0.0
    %659 = vmatprep.subr.mxu0 0.0
    %660 = vmatpush2.msra.mxu0 0.0
    %661 = vmatprep.subr.mxu0 0.0
    %662 = vmatpush2.msra.mxu0 0.0
    %663 = vmatprep.subr.mxu0 0.0
    %664 = vmatpush2.msra.mxu0 0.0
    %665 = vmatprep.mubr.f32.mxu0 0.0
    %666 = vmatmul.mubr.f32.gmra.mxu0 %v124
    %v667 = vpop.f32.mrf.mxu0
    %v668 = vadd.f32 %v120, %v667
    %v669 = vpop.f32.mrf.mxu0
    %v670 = vadd.f32 %v120, %v669
    %671 = vdwg.mxu0
    %672 = vmatprep.subr.mxu0 0.0
    %673 = vmatpush1.msra.mxu0 0.0
    %674 = vmatprep.subr.mxu0 0.0
    %675 = vmatpush1.msra.mxu0 0.0
    %676 = vmatprep.subr.mxu0 0.0
    %677 = vmatpush1.msra.mxu0 0.0
    %678 = vmatprep.subr.mxu0 0.0
    %679 = vmatpush1.msra.mxu0 0.0
    %680 = vmatprep.subr.mxu0 0.0
    %681 = vmatpush1.msra.mxu0 0.0
    %682 = vmatprep.subr.mxu0 0.0
    %683 = vmatpush1.msra.mxu0 0.0
    %684 = vmatprep.subr.mxu0 0.0
    %685 = vmatpush1.msra.mxu0 0.0
    %686 = vmatprep.subr.mxu0 0.0
    %687 = vmatpush1.msra.mxu0 0.0
    %688 = vmatprep.subr.mxu0 0.0
    %689 = vmatpush1.msra.mxu0 0.0
    %690 = vmatprep.subr.mxu0 0.0
    %691 = vmatpush1.msra.mxu0 0.0
    %692 = vmatprep.subr.mxu0 0.0
    %693 = vmatpush1.msra.mxu0 0.0
    %694 = vmatprep.subr.mxu0 %v173
    %695 = vmatpush1.msra.mxu0 %v170
    %696 = vmatprep.subr.mxu0 %v99
    %697 = vmatpush1.msra.mxu0 %v98
    %698 = vmatprep.subr.mxu0 %v83
    %699 = vmatpush1.msra.mxu0 %v82
    %700 = vmatprep.subr.mxu0 %v67
    %701 = vmatpush1.msra.mxu0 %v66
    %702 = vmatprep.subr.mxu0 %v51
    %703 = vmatpush1.msra.mxu0 %v50
    %704 = vmatprep.subr.mxu0 0.0
    %705 = vmatpush2.msra.mxu0 0.0
    %706 = vmatprep.subr.mxu0 0.0
    %707 = vmatpush2.msra.mxu0 0.0
    %708 = vmatprep.subr.mxu0 0.0
    %709 = vmatpush2.msra.mxu0 0.0
    %710 = vmatprep.subr.mxu0 0.0
    %711 = vmatpush2.msra.mxu0 0.0
    %712 = vmatprep.subr.mxu0 0.0
    %713 = vmatpush2.msra.mxu0 0.0
    %714 = vmatprep.subr.mxu0 0.0
    %715 = vmatpush2.msra.mxu0 0.0
    %716 = vmatprep.subr.mxu0 0.0
    %717 = vmatpush2.msra.mxu0 0.0
    %718 = vmatprep.subr.mxu0 0.0
    %719 = vmatpush2.msra.mxu0 0.0
    %720 = vmatprep.subr.mxu0 0.0
    %721 = vmatpush2.msra.mxu0 0.0
    %722 = vmatprep.subr.mxu0 0.0
    %723 = vmatpush2.msra.mxu0 0.0
    %724 = vmatprep.subr.mxu0 0.0
    %725 = vmatpush2.msra.mxu0 0.0
    %726 = vmatprep.subr.mxu0 0.0
    %727 = vmatpush2.msra.mxu0 0.0
    %728 = vmatprep.subr.mxu0 0.0
    %729 = vmatpush2.msra.mxu0 0.0
    %730 = vmatprep.subr.mxu0 0.0
    %731 = vmatpush2.msra.mxu0 0.0
    %732 = vmatprep.subr.mxu0 0.0
    %733 = vmatpush2.msra.mxu0 0.0
    %734 = vmatprep.subr.mxu0 0.0
    %735 = vmatpush2.msra.mxu0 0.0
    %736 = vmatprep.mubr.f32.mxu0 0.0
    %737 = vmatmul.mubr.f32.gmra.mxu0 %v124
    %v738 = vpop.f32.mrf.mxu0
    %v739 = vadd.f32 %v120, %v738
    %v740 = vpop.f32.mrf.mxu0
    %v741 = vadd.f32 %v120, %v740
    %742 = vdwg.mxu0
    %v743 = vadd.f32 %v242, %v244
    %v744 = vadd.f32 %v743, %v313
    %v745 = vadd.f32 %v744, %v315
    %v746 = vadd.f32 %v745, %v384
    %v747 = vadd.f32 %v746, %v386
    %v748 = vadd.f32 %v747, %v455
    %v749 = vadd.f32 %v748, %v457
    %v750 = vadd.f32 %v749, %v526
    %v751 = vadd.f32 %v750, %v528
    %v752 = vadd.f32 %v751, %v597
    %v753 = vadd.f32 %v752, %v599
    %v754 = vadd.f32 %v753, %v668
    %v755 = vadd.f32 %v754, %v670
    %v756 = vadd.f32 %v755, %v739
    %v757 = vadd.f32 %v756, %v741
    %758 = vadd.xlane.f32.xlu0 %v757
    %v759 = vpop.xlane.xlu0 %758
    %v760 = vmul.f32 %v759, 0.00048828125
    %v761 = vsub.f32 %v242, %v760
    %v762 = vsub.f32 %v244, %v760
    %v763 = vsub.f32 %v313, %v760
    %v764 = vsub.f32 %v315, %v760
    %v765 = vsub.f32 %v384, %v760
    %v766 = vsub.f32 %v386, %v760
    %v767 = vsub.f32 %v455, %v760
    %v768 = vsub.f32 %v457, %v760
    %v769 = vsub.f32 %v526, %v760
    %v770 = vsub.f32 %v528, %v760
    %v771 = vsub.f32 %v597, %v760
    %v772 = vsub.f32 %v599, %v760
    %v773 = vsub.f32 %v668, %v760
    %v774 = vsub.f32 %v670, %v760
    %v775 = vsub.f32 %v739, %v760
    %v776 = vsub.f32 %v741, %v760
    %v777 = vmul.f32 %v761, %v761
    %v778 = vmul.f32 %v762, %v762
    %v779 = vmul.f32 %v763, %v763
    %v780 = vmul.f32 %v764, %v764
    %v781 = vmul.f32 %v765, %v765
    %v782 = vmul.f32 %v766, %v766
    %v783 = vmul.f32 %v767, %v767
    %v784 = vmul.f32 %v768, %v768
    %v785 = vmul.f32 %v769, %v769
    %v786 = vmul.f32 %v770, %v770
    %v787 = vmul.f32 %v771, %v771
    %v788 = vmul.f32 %v772, %v772
    %v789 = vmul.f32 %v773, %v773
    %v790 = vmul.f32 %v774, %v774
    %v791 = vmul.f32 %v775, %v775
    %v792 = vmul.f32 %v776, %v776
    %v793 = vadd.f32 %v777, %v778
    %v794 = vadd.f32 %v793, %v779
    %v795 = vadd.f32 %v794, %v780
    %v796 = vadd.f32 %v795, %v781
    %v797 = vadd.f32 %v796, %v782
    %v798 = vadd.f32 %v797, %v783
    %v799 = vadd.f32 %v798, %v784
    %v800 = vadd.f32 %v799, %v785
    %v801 = vadd.f32 %v800, %v786
    %v802 = vadd.f32 %v801, %v787
    %v803 = vadd.f32 %v802, %v788
    %v804 = vadd.f32 %v803, %v789
    %v805 = vadd.f32 %v804, %v790
    %v806 = vadd.f32 %v805, %v791
    %v807 = vadd.f32 %v806, %v792
    %808 = vadd.xlane.f32.xlu0 %v807
    %v809 = vpop.xlane.xlu0 %808
    %v810 = vmul.f32 %v809, 0.00048828125
    %v811 = vld [vmem:[%s3] sm:$0xff]
    %v812 = vadd.f32 %v810, 1e-05
    %v813 = vrsqrt.pop %v812
    %v814 = vmul.f32 %v811, %v813
    %816 = vset.pattern.permute.xlu0 0
    %817 = vperm.xlu0 %816, %v814
    %v818 = vpop.permute.xlu0 %817
    %v820 = vmul.f32 %v761, %v818
    %v821 = vmul.f32 %v762, %v818
    %v822 = vmul.f32 %v763, %v818
    %v823 = vmul.f32 %v764, %v818
    %v824 = vmul.f32 %v765, %v818
    %v825 = vmul.f32 %v766, %v818
    %v826 = vmul.f32 %v767, %v818
    %v827 = vmul.f32 %v768, %v818
    %v828 = vmul.f32 %v769, %v818
    %v829 = vmul.f32 %v770, %v818
    %v830 = vmul.f32 %v771, %v818
    %v831 = vmul.f32 %v772, %v818
    %v832 = vmul.f32 %v773, %v818
    %v833 = vmul.f32 %v774, %v818
    %v834 = vmul.f32 %v775, %v818
    %v835 = vmul.f32 %v776, %v818
    %v836 = vld [vmem:[%s4] sm:$0xff]
    %838 = vset.pattern.permute.xlu0 0
    %839 = vperm.xlu0 %838, %v836
    %v840 = vpop.permute.xlu0 %839
    %v842 = vadd.f32 %v820, %v840
    %v843 = vadd.f32 %v821, %v840
    %v844 = vadd.f32 %v822, %v840
    %v845 = vadd.f32 %v823, %v840
    %v846 = vadd.f32 %v824, %v840
    %v847 = vadd.f32 %v825, %v840
    %v848 = vadd.f32 %v826, %v840
    %v849 = vadd.f32 %v827, %v840
    %v850 = vadd.f32 %v828, %v840
    %v851 = vadd.f32 %v829, %v840
    %v852 = vadd.f32 %v830, %v840
    %v853 = vadd.f32 %v831, %v840
    %v854 = vadd.f32 %v832, %v840
    %v855 = vadd.f32 %v833, %v840
    %v856 = vadd.f32 %v834, %v840
    %v857 = vadd.f32 %v835, %v840
    %vm858 = vcmp.ge.f32.partialorder %v842, 0.0
    %vm859 = vcmp.ge.f32.partialorder %v843, 0.0
    %vm860 = vcmp.ge.f32.partialorder %v844, 0.0
    %vm861 = vcmp.ge.f32.partialorder %v845, 0.0
    %vm862 = vcmp.ge.f32.partialorder %v846, 0.0
    %vm863 = vcmp.ge.f32.partialorder %v847, 0.0
    %vm864 = vcmp.ge.f32.partialorder %v848, 0.0
    %vm865 = vcmp.ge.f32.partialorder %v849, 0.0
    %vm866 = vcmp.ge.f32.partialorder %v850, 0.0
    %vm867 = vcmp.ge.f32.partialorder %v851, 0.0
    %vm868 = vcmp.ge.f32.partialorder %v852, 0.0
    %vm869 = vcmp.ge.f32.partialorder %v853, 0.0
    %vm870 = vcmp.ge.f32.partialorder %v854, 0.0
    %vm871 = vcmp.ge.f32.partialorder %v855, 0.0
    %vm872 = vcmp.ge.f32.partialorder %v856, 0.0
    %vm873 = vcmp.ge.f32.partialorder %v857, 0.0
    %v874 = vmul.f32 %v842, 0.2
    %v875 = vmul.f32 %v843, 0.2
    %v876 = vmul.f32 %v844, 0.2
    %v877 = vmul.f32 %v845, 0.2
    %v878 = vmul.f32 %v846, 0.2
    %v879 = vmul.f32 %v847, 0.2
    %v880 = vmul.f32 %v848, 0.2
    %v881 = vmul.f32 %v849, 0.2
    %v882 = vmul.f32 %v850, 0.2
    %v883 = vmul.f32 %v851, 0.2
    %v884 = vmul.f32 %v852, 0.2
    %v885 = vmul.f32 %v853, 0.2
    %v886 = vmul.f32 %v854, 0.2
    %v887 = vmul.f32 %v855, 0.2
    %v888 = vmul.f32 %v856, 0.2
    %v889 = vmul.f32 %v857, 0.2
    %v890 = vsel %vm858, %v842, %v874
    %v891 = vsel %vm859, %v843, %v875
    %v892 = vsel %vm860, %v844, %v876
    %v893 = vsel %vm861, %v845, %v877
    %v894 = vsel %vm862, %v846, %v878
    %v895 = vsel %vm863, %v847, %v879
    %v896 = vsel %vm864, %v848, %v880
    %v897 = vsel %vm865, %v849, %v881
    %v898 = vsel %vm866, %v850, %v882
    %v899 = vsel %vm867, %v851, %v883
    %v900 = vsel %vm868, %v852, %v884
    %v901 = vsel %vm869, %v853, %v885
    %v902 = vsel %vm870, %v854, %v886
    %v903 = vsel %vm871, %v855, %v887
    %v904 = vsel %vm872, %v856, %v888
    %v905 = vsel %vm873, %v857, %v889
    %906 = vst [vmem:[#allocation5] sm:$0xff] %v890
    %907 = vst [vmem:[#allocation5 + $0x8] sm:$0xff] %v891
    %908 = vst [vmem:[#allocation5 + $0x10] sm:$0xff] %v892
    %909 = vst [vmem:[#allocation5 + $0x18] sm:$0xff] %v893
    %910 = vst [vmem:[#allocation5 + $0x20] sm:$0xff] %v894
    %911 = vst [vmem:[#allocation5 + $0x28] sm:$0xff] %v895
    %912 = vst [vmem:[#allocation5 + $0x30] sm:$0xff] %v896
    %913 = vst [vmem:[#allocation5 + $0x38] sm:$0xff] %v897
    %s914 = scalar_lea.vmem [#allocation5], 64
    %915 = vst [vmem:[%s914] sm:$0xff] %v898
    %916 = vst [vmem:[%s914 + $0x8] sm:$0xff] %v899
    %917 = vst [vmem:[%s914 + $0x10] sm:$0xff] %v900
    %918 = vst [vmem:[%s914 + $0x18] sm:$0xff] %v901
    %919 = vst [vmem:[%s914 + $0x20] sm:$0xff] %v902
    %920 = vst [vmem:[%s914 + $0x28] sm:$0xff] %v903
    %921 = vst [vmem:[%s914 + $0x30] sm:$0xff] %v904
    %922 = vst [vmem:[%s914 + $0x38] sm:$0xff] %v905
    // Predicated region
    $region26: #{tpu_custom_call.1} parent=1 // pred_check
      _
    $region27: #{tpu_custom_call.1} parent=1 // pred_check_branch
      %924 = sbr.rel (0) target = $region29
    $region28: #{tpu_custom_call.1} parent=1 // pred_region
      %s926 = ssub.s32 2048, 2048
      %927 = vsyncadd [#allocation4], %s926
      %s928 = sshll.u32 [#allocation5], 4
      %s929 = int_to_ptr.vmem [resolvable:$true] %s928
      %934 = dma.vmem_to_hbm [thread:$0]  %s929, 2048, %s5, [#allocation4], 1024, 1024, 64
    $region29: #{tpu_custom_call.1} parent=1 // pred_fallthru
      _
    // Predicated region
    $region30: #{tpu_custom_call.1} parent=1 // pred_check
      _
    $region31: #{tpu_custom_call.1} parent=1 // pred_check_branch
      %936 = sbr.rel (0) target = $region33
    $region32: #{tpu_custom_call.1} parent=1 // pred_region
      %937 = dma.done [#allocation4], 2048
    $region33: #{tpu_custom_call.1} parent=1 // pred_fallthru
      _
    %938 = vsyncpa [#allocation3], 1
    %939 = vsyncpa [#allocation4], 1

</llo_original>
